<compile_context>
chip_gen: v7x
topology: tpu7x:2x2x1
jax: 0.10.0
libtpu: 0.0.40
codegen_flags: <defaults>
</compile_context>

<pallas_src>
import jax
import jax.numpy as jnp
import numpy as np
from jax.experimental import pallas as pl
from jax.experimental.pallas import tpu as pltpu


NEG_INF = -1e30  # finite "masked" fill: avoids inf - inf = NaN on fully-masked tiles


def _round_up(x: int, m: int) -> int:
    return (x + m - 1) // m * m


def _sdpa_kernel(q_ref, w_ref, k_ref, v_ref, add_ref,   # inputs
                 out_ref, attn_ref,                      # outputs (resident across kv)
                 m_sc, l_sc, acc_sc):                    # VMEM scratch
    """One (batch row, KV tile) grid step of online-softmax attention."""
    kv = pl.program_id(1)
    n_kv = pl.num_programs(1)

    @pl.when(kv == 0)
    def _init():
        m_sc[...] = jnp.full(m_sc.shape, NEG_INF, m_sc.dtype)
        l_sc[...] = jnp.zeros(l_sc.shape, l_sc.dtype)
        acc_sc[...] = jnp.zeros(acc_sc.shape, acc_sc.dtype)
        attn_ref[...] = jnp.zeros(attn_ref.shape, attn_ref.dtype)

    # --- query projection on the MXU: (1, Dd) @ (Dd, De), f32 accumulation ------
    qw = jnp.dot(q_ref[0], w_ref[...], preferred_element_type=jnp.float32)  # (1, De) f32
    qw = qw.astype(k_ref.dtype)[None]                                       # (1, 1, De)

    # --- scores for this KV tile on the MXU: (1,1,De) x (1,Tk,De) -> (1,1,Tk) ---
    s = jnp.einsum("bqe,bke->bqk", qw, k_ref[...],
                   preferred_element_type=jnp.float32)                      # f32
    s = s + add_ref[:, pl.ds(kv, 1), :]        # folded mask + bias (+ padding fill)

    # --- online softmax update (f32) --------------------------------------------
    m_prev = m_sc[...]                                        # (1, 1, 1)
    m_next = jnp.maximum(m_prev, jnp.max(s, axis=-1, keepdims=True))
    alpha = jnp.exp(m_prev - m_next)                          # rescale for old state
    p = jnp.exp(s - m_next)                                   # (1, 1, Tk)
    l_sc[...] = alpha * l_sc[...] + jnp.sum(p, axis=-1, keepdims=True)
    m_sc[...] = m_next

    # --- weighted values on the MXU: (1,1,Tk) x (1,Tk,Dv) -> (1,1,Dv) -----------
    pv = jnp.einsum("bqk,bkd->bqd", p.astype(v_ref.dtype), v_ref[...],
                    preferred_element_type=jnp.float32)
    acc_sc[...] = alpha * acc_sc[...] + pv

    # --- full attention-weight row (kept resident across the KV axis) -----------
    attn_ref[...] = (attn_ref[...].astype(jnp.float32) * alpha).astype(attn_ref.dtype)
    attn_ref[:, pl.ds(kv, 1), :] = p.astype(attn_ref.dtype)   # unnormalized, rel. m_next

    @pl.when(kv == n_kv - 1)
    def _finalize():
        inv_l = pl.reciprocal(l_sc[...], approx=True)         # EUP, frees the VALU
        out_ref[...] = (acc_sc[...] * inv_l).astype(out_ref.dtype)
        attn_ref[...] = (attn_ref[...].astype(jnp.float32) * inv_l).astype(attn_ref.dtype)


def scaled_dot_product_attention(query, key, value, mask, weight, bias=None,
                                 *, compute_dtype=jnp.bfloat16, kv_tile=None):
    """Pallas-TPU forward of ScaledDotProductAttention.

    query:(B,Dd)  key:(B,T,De)  value:(B,T,Dv)  mask:(B,>=T) nonzero=>masked
    weight:(Dd,De)  bias:(B,T) or None.
    Returns (attn_out (B,Dv), attn_weight (B,T)) in query.dtype.
    """
    B, Dd = query.shape
    _, T, De = key.shape
    Dv = value.shape[-1]
    out_dtype = query.dtype

    # Lane-dense padding (multiples of 128) for all lane/output dimensions.
    t_pad = max(128, _round_up(T, 128))
    dv_pad = max(128, _round_up(Dv, 128))
    if kv_tile is None:  # biggest 128-multiple tile (<= 512) dividing t_pad
        kv_tile = 512 if t_pad % 512 == 0 else (256 if t_pad % 256 == 0 else 128)
    n_kv = t_pad // kv_tile

    # Fold mask (+ optional bias) into ONE additive f32 term; padded keys masked too.
    add = jnp.where(mask[:, :T].astype(bool), jnp.float32(NEG_INF), jnp.float32(0.0))
    if bias is not None:
        add = add + bias.astype(jnp.float32)
    add = jnp.pad(add, ((0, 0), (0, t_pad - T)), constant_values=NEG_INF)
    add = add.reshape(B, n_kv, kv_tile)

    # bf16 matmul operands (f32 accumulation happens inside the kernel).
    q_p = query.reshape(B, 1, Dd).astype(compute_dtype)
    w_p = weight.astype(compute_dtype)
    k_p = jnp.pad(key, ((0, 0), (0, t_pad - T), (0, 0))).astype(compute_dtype)
    v_p = jnp.pad(value, ((0, 0), (0, t_pad - T), (0, dv_pad - Dv))).astype(compute_dtype)

    out_p, attn_p = pl.pallas_call(
        _sdpa_kernel,
        out_shape=(
            jax.ShapeDtypeStruct((B, 1, dv_pad), out_dtype),      # attn_out (padded)
            jax.ShapeDtypeStruct((B, n_kv, kv_tile), out_dtype),  # attn weights (padded)
        ),
        grid_spec=pltpu.PrefetchScalarGridSpec(
            num_scalar_prefetch=0,
            grid=(B, n_kv),
            in_specs=[
                pl.BlockSpec((1, 1, Dd), lambda b, j: (b, 0, 0)),            # query row
                pl.BlockSpec((Dd, De), lambda b, j: (0, 0)),                 # weight
                pl.BlockSpec((1, kv_tile, De), lambda b, j: (b, j, 0)),      # K tile
                pl.BlockSpec((1, kv_tile, dv_pad), lambda b, j: (b, j, 0)),  # V tile
                pl.BlockSpec((1, n_kv, kv_tile), lambda b, j: (b, 0, 0)),    # mask+bias row
            ],
            out_specs=(
                pl.BlockSpec((1, 1, dv_pad), lambda b, j: (b, 0, 0)),        # resident
                pl.BlockSpec((1, n_kv, kv_tile), lambda b, j: (b, 0, 0)),    # resident
            ),
            scratch_shapes=[
                pltpu.VMEM((1, 1, 1), jnp.float32),       # running max
                pltpu.VMEM((1, 1, 1), jnp.float32),       # running denominator
                pltpu.VMEM((1, 1, dv_pad), jnp.float32),  # f32 output accumulator
            ],
        ),
        compiler_params=pltpu.CompilerParams(
            dimension_semantics=("parallel", "arbitrary"),  # batch -> megacore / 2nd TC
            vmem_limit_bytes=32 * 1024 * 1024,              # explicit scoped-VMEM budget
        ),
    )(q_p, w_p, k_p, v_p, add)

    attn_out = out_p.reshape(B, dv_pad)[:, :Dv]
    attn_w = attn_p.reshape(B, t_pad)[:, :T]
    return attn_out, attn_w


def reference(query, key, value, mask, weight, bias=None, compute_dtype=jnp.bfloat16):
    """Plain-JAX port of the PyTorch module (matmul operands in compute_dtype)."""
    qw = jnp.dot(query.astype(compute_dtype), weight.astype(compute_dtype),
                 preferred_element_type=jnp.float32)
    s = jnp.einsum("bte,be->bt", key.astype(compute_dtype), qw.astype(compute_dtype),
                   preferred_element_type=jnp.float32)
    if bias is not None:
        s = s + bias.astype(jnp.float32)
    s = jnp.where(mask[:, :s.shape[-1]].astype(bool), -jnp.inf, s)
    attn = jax.nn.softmax(s, axis=-1)
    out = jnp.einsum("bt,btd->bd", attn.astype(compute_dtype), value.astype(compute_dtype),
                     preferred_element_type=jnp.float32)
    return out.astype(query.dtype), attn.astype(query.dtype)


if __name__ == "__main__":
    B, T = 2, 8
    Dd, De, Dv = 32, 32, 32   # decoder_hidden_dim, encoder_final_out_dim, value dim

    root = jax.random.PRNGKey(0)
    k_w, k_q, k_k, k_v, k_b = jax.random.split(root, 5)

    # nn.init.normal_(weight, std=sqrt(2/(Dd+De)))
    weight = jax.random.normal(k_w, (Dd, De), dtype=jnp.float32) * np.sqrt(2.0 / (Dd + De))
    query = jax.random.normal(k_q, (B, Dd), dtype=jnp.float32)
    key_t = jax.random.normal(k_k, (B, T, De), dtype=jnp.float32)
    value = jax.random.normal(k_v, (B, T, Dv), dtype=jnp.float32)
    bias = 0.1 * jax.random.normal(k_b, (B, T), dtype=jnp.float32)
    valid_len = jnp.array([[6], [5]], dtype=jnp.int32)
    mask = jnp.arange(T, dtype=jnp.int32)[None, :] >= valid_len   # True => masked

    # bf16 MXU operands + approx EUP reciprocal => compare at bf16-level tolerance.
    TOL = dict(atol=2e-2, rtol=2e-2)

    attn_out, attn_w = scaled_dot_product_attention(query, key_t, value, mask, weight, bias)
    jax.block_until_ready((attn_out, attn_w))
    ref_out, ref_w = reference(query, key_t, value, mask, weight, bias)
    assert attn_out.shape == (B, Dv) and attn_w.shape == (B, T)
    assert bool(jnp.allclose(attn_w, ref_w, **TOL)), \
        f"attn weights mismatch: {float(jnp.max(jnp.abs(attn_w - ref_w)))}"
    assert bool(jnp.allclose(attn_out, ref_out, **TOL)), \
        f"attn out mismatch: {float(jnp.max(jnp.abs(attn_out - ref_out)))}"

    # no-bias path (bias folded away -> no extra zeros DMA, same kernel structure)
    attn_out2, attn_w2 = scaled_dot_product_attention(query, key_t, value, mask, weight, None)
    jax.block_until_ready((attn_out2, attn_w2))
    ref_out2, ref_w2 = reference(query, key_t, value, mask, weight, None)
    assert bool(jnp.allclose(attn_w2, ref_w2, **TOL))
    assert bool(jnp.allclose(attn_out2, ref_out2, **TOL))

    print("KERNEL_OK")
</pallas_src>

<mosaic_0001>
module attributes {stable_mosaic.version = 11 : i64} {
  func.func @_sdpa_kernel(%arg0: i32, %arg1: i32, %arg2: memref<1x1x32xbf16, #tpu.memory_space<vmem>>, %arg3: memref<32x32xbf16, #tpu.memory_space<vmem>>, %arg4: memref<1x128x32xbf16, #tpu.memory_space<vmem>>, %arg5: memref<1x128x128xbf16, #tpu.memory_space<vmem>>, %arg6: memref<1x1x128xf32, #tpu.memory_space<vmem>>, %arg7: memref<1x1x128xf32, #tpu.memory_space<vmem>>, %arg8: memref<1x1x128xf32, #tpu.memory_space<vmem>>, %arg9: memref<1x1x1xf32, #tpu.memory_space<vmem>>, %arg10: memref<1x1x1xf32, #tpu.memory_space<vmem>>, %arg11: memref<1x1x128xf32, #tpu.memory_space<vmem>>) attributes {dimension_semantics = [#tpu.dimension_semantics<parallel>, #tpu.dimension_semantics<arbitrary>], iteration_bounds = array<i64: 2, 1>, scalar_prefetch = 0 : i64, scratch_operands = 3 : i64, tpu.core_type = #tpu.core_type<tc>, window_params = [{transform_indices = @transform_0, window_bounds = array<i64: 1, 1, 32>}, {pipeline_mode = #tpu.pipeline_mode<synchronous>, transform_indices = @transform_1, window_bounds = array<i64: 32, 32>}, {transform_indices = @transform_2, window_bounds = array<i64: 1, 128, 32>}, {transform_indices = @transform_3, window_bounds = array<i64: 1, 128, 128>}, {transform_indices = @transform_4, window_bounds = array<i64: 1, 1, 128>}, {transform_indices = @transform_5, window_bounds = array<i64: 1, 1, 128>}, {transform_indices = @transform_6, window_bounds = array<i64: 1, 1, 128>}]} {
    %c0_i32 = arith.constant 0 : i32
    %0 = arith.cmpi eq, %arg1, %c0_i32 : i32
    %1 = arith.extui %0 : i1 to i32
    %c0_i32_0 = arith.constant 0 : i32
    %2 = arith.cmpi ne, %1, %c0_i32_0 : i32
    scf.if %2 {
      %cst_45 = arith.constant -1.000000e+30 : f32
      %47 = vector.broadcast %cst_45 : f32 to vector<1x1x1xf32>
      %c0_46 = arith.constant 0 : index
      %c0_47 = arith.constant 0 : index
      %c0_48 = arith.constant 0 : index
      %48 = vector.load %arg9[%c0_46, %c0_47, %c0_48] : memref<1x1x1xf32, #tpu.memory_space<vmem>>, vector<1x1x1xf32>
      tpu.vector_store %arg9[%c0_46, %c0_47, %c0_48], %47 {strides = array<i32>} : memref<1x1x1xf32, #tpu.memory_space<vmem>>, vector<1x1x1xf32>,
      %cst_49 = arith.constant 0.000000e+00 : f32
      %49 = vector.broadcast %cst_49 : f32 to vector<1x1x1xf32>
      %c0_50 = arith.constant 0 : index
      %c0_51 = arith.constant 0 : index
      %c0_52 = arith.constant 0 : index
      %50 = vector.load %arg10[%c0_50, %c0_51, %c0_52] : memref<1x1x1xf32, #tpu.memory_space<vmem>>, vector<1x1x1xf32>
      tpu.vector_store %arg10[%c0_50, %c0_51, %c0_52], %49 {strides = array<i32>} : memref<1x1x1xf32, #tpu.memory_space<vmem>>, vector<1x1x1xf32>,
      %cst_53 = arith.constant 0.000000e+00 : f32
      %51 = vector.broadcast %cst_53 : f32 to vector<1x1x128xf32>
      %c0_54 = arith.constant 0 : index
      %c0_55 = arith.constant 0 : index
      %c0_56 = arith.constant 0 : index
      %52 = vector.load %arg11[%c0_54, %c0_55, %c0_56] : memref<1x1x128xf32, #tpu.memory_space<vmem>>, vector<1x1x128xf32>
      tpu.vector_store %arg11[%c0_54, %c0_55, %c0_56], %51 {strides = array<i32>} : memref<1x1x128xf32, #tpu.memory_space<vmem>>, vector<1x1x128xf32>,
      %cst_57 = arith.constant 0.000000e+00 : f32
      %53 = vector.broadcast %cst_57 : f32 to vector<1x1x128xf32>
      %c0_58 = arith.constant 0 : index
      %c0_59 = arith.constant 0 : index
      %c0_60 = arith.constant 0 : index
      %54 = vector.load %arg8[%c0_58, %c0_59, %c0_60] : memref<1x1x128xf32, #tpu.memory_space<vmem>>, vector<1x1x128xf32>
      tpu.vector_store %arg8[%c0_58, %c0_59, %c0_60], %53 {strides = array<i32>} : memref<1x1x128xf32, #tpu.memory_space<vmem>>, vector<1x1x128xf32>,
    } else {
    }
    %c0 = arith.constant 0 : index
    %c0_1 = arith.constant 0 : index
    %c0_2 = arith.constant 0 : index
    %3 = vector.load %arg2[%c0, %c0_1, %c0_2] : memref<1x1x32xbf16, #tpu.memory_space<vmem>>, vector<1x1x32xbf16>
    %4 = vector.shape_cast %3 : vector<1x1x32xbf16> to vector<1x32xbf16>
    %c0_3 = arith.constant 0 : index
    %c0_4 = arith.constant 0 : index
    %5 = vector.load %arg3[%c0_3, %c0_4] : memref<32x32xbf16, #tpu.memory_space<vmem>>, vector<32x32xbf16>
    %cst = arith.constant dense<0.000000e+00> : vector<1x32xf32>
    %6 = tpu.matmul %4, %5, %cst {dimension_numbers = #tpu.dot_dimension_numbers<[1], [0], [0], [1], [0, 0, 1, 1], [], []>} : vector<1x32xbf16>, vector<32x32xbf16>, vector<1x32xf32> -> vector<1x32xf32>
    %7 = arith.truncf %6 : vector<1x32xf32> to vector<1x32xbf16>
    %8 = vector.shape_cast %7 : vector<1x32xbf16> to vector<1x1x32xbf16>
    %c0_5 = arith.constant 0 : index
    %c0_6 = arith.constant 0 : index
    %c0_7 = arith.constant 0 : index
    %9 = vector.load %arg4[%c0_5, %c0_6, %c0_7] : memref<1x128x32xbf16, #tpu.memory_space<vmem>>, vector<1x128x32xbf16>
    "tpu.trace_start"() <{level = 10 : i32, message = "bqe,bke->bqk"}> : () -> ()
    %cst_8 = arith.constant dense<0.000000e+00> : vector<1x1x128xf32>
    %10 = tpu.matmul %8, %9, %cst_8 {dimension_numbers = #tpu.dot_dimension_numbers<[2], [2], [1], [1], [0, 0, 0, 1, 1, 1], [0], [0]>} : vector<1x1x32xbf16>, vector<1x128x32xbf16>, vector<1x1x128xf32> -> vector<1x1x128xf32>
    "tpu.trace_stop"() : () -> ()
    %c0_9 = arith.constant 0 : index
    %11 = arith.index_cast %arg1 : i32 to index
    %c0_10 = arith.constant 0 : index
    %12 = vector.load %arg6[%c0_9, %11, %c0_10] : memref<1x1x128xf32, #tpu.memory_space<vmem>>, vector<1x1x128xf32>
    %13 = arith.addf %10, %12 : vector<1x1x128xf32>
    %c0_11 = arith.constant 0 : index
    %c0_12 = arith.constant 0 : index
    %c0_13 = arith.constant 0 : index
    %14 = vector.load %arg9[%c0_11, %c0_12, %c0_13] : memref<1x1x1xf32, #tpu.memory_space<vmem>>, vector<1x1x1xf32>
    %cst_14 = arith.constant dense<0xFF800000> : vector<1x1xf32>
    %15 = vector.multi_reduction <maximumf>, %13, %cst_14 [2] : vector<1x1x128xf32> to vector<1x1xf32>
    %16 = vector.shape_cast %15 : vector<1x1xf32> to vector<1x1x1xf32>
    %17 = arith.maximumf %14, %16 : vector<1x1x1xf32>
    %18 = arith.subf %14, %17 : vector<1x1x1xf32>
    %19 = math.exp %18 : vector<1x1x1xf32>
    %20 = vector.broadcast %17 : vector<1x1x1xf32> to vector<1x1x128xf32>
    %21 = arith.subf %13, %20 : vector<1x1x128xf32>
    %22 = math.exp %21 : vector<1x1x128xf32>
    %c0_15 = arith.constant 0 : index
    %c0_16 = arith.constant 0 : index
    %c0_17 = arith.constant 0 : index
    %23 = vector.load %arg10[%c0_15, %c0_16, %c0_17] : memref<1x1x1xf32, #tpu.memory_space<vmem>>, vector<1x1x1xf32>
    %24 = arith.mulf %19, %23 : vector<1x1x1xf32>
    %cst_18 = arith.constant dense<0.000000e+00> : vector<1x1xf32>
    %25 = vector.multi_reduction <add>, %22, %cst_18 [2] : vector<1x1x128xf32> to vector<1x1xf32>
    %26 = vector.shape_cast %25 : vector<1x1xf32> to vector<1x1x1xf32>
    %27 = arith.addf %24, %26 : vector<1x1x1xf32>
    %c0_19 = arith.constant 0 : index
    %c0_20 = arith.constant 0 : index
    %c0_21 = arith.constant 0 : index
    %28 = vector.load %arg10[%c0_19, %c0_20, %c0_21] : memref<1x1x1xf32, #tpu.memory_space<vmem>>, vector<1x1x1xf32>
    tpu.vector_store %arg10[%c0_19, %c0_20, %c0_21], %27 {strides = array<i32>} : memref<1x1x1xf32, #tpu.memory_space<vmem>>, vector<1x1x1xf32>,
    %c0_22 = arith.constant 0 : index
    %c0_23 = arith.constant 0 : index
    %c0_24 = arith.constant 0 : index
    %29 = vector.load %arg9[%c0_22, %c0_23, %c0_24] : memref<1x1x1xf32, #tpu.memory_space<vmem>>, vector<1x1x1xf32>
    tpu.vector_store %arg9[%c0_22, %c0_23, %c0_24], %17 {strides = array<i32>} : memref<1x1x1xf32, #tpu.memory_space<vmem>>, vector<1x1x1xf32>,
    %30 = arith.truncf %22 : vector<1x1x128xf32> to vector<1x1x128xbf16>
    %c0_25 = arith.constant 0 : index
    %c0_26 = arith.constant 0 : index
    %c0_27 = arith.constant 0 : index
    %31 = vector.load %arg5[%c0_25, %c0_26, %c0_27] : memref<1x128x128xbf16, #tpu.memory_space<vmem>>, vector<1x128x128xbf16>
    "tpu.trace_start"() <{level = 10 : i32, message = "bqk,bkd->bqd"}> : () -> ()
    %cst_28 = arith.constant dense<0.000000e+00> : vector<1x1x128xf32>
    %32 = tpu.matmul %30, %31, %cst_28 {dimension_numbers = #tpu.dot_dimension_numbers<[2], [1], [1], [2], [0, 0, 0, 1, 1, 2], [0], [0]>} : vector<1x1x128xbf16>, vector<1x128x128xbf16>, vector<1x1x128xf32> -> vector<1x1x128xf32>
    "tpu.trace_stop"() : () -> ()
    %c0_29 = arith.constant 0 : index
    %c0_30 = arith.constant 0 : index
    %c0_31 = arith.constant 0 : index
    %33 = vector.load %arg11[%c0_29, %c0_30, %c0_31] : memref<1x1x128xf32, #tpu.memory_space<vmem>>, vector<1x1x128xf32>
    %34 = vector.broadcast %19 : vector<1x1x1xf32> to vector<1x1x128xf32>
    %35 = arith.mulf %34, %33 : vector<1x1x128xf32>
    %36 = arith.addf %35, %32 : vector<1x1x128xf32>
    %c0_32 = arith.constant 0 : index
    %c0_33 = arith.constant 0 : index
    %c0_34 = arith.constant 0 : index
    %37 = vector.load %arg11[%c0_32, %c0_33, %c0_34] : memref<1x1x128xf32, #tpu.memory_space<vmem>>, vector<1x1x128xf32>
    tpu.vector_store %arg11[%c0_32, %c0_33, %c0_34], %36 {strides = array<i32>} : memref<1x1x128xf32, #tpu.memory_space<vmem>>, vector<1x1x128xf32>,
    %c0_35 = arith.constant 0 : index
    %c0_36 = arith.constant 0 : index
    %c0_37 = arith.constant 0 : index
    %38 = vector.load %arg8[%c0_35, %c0_36, %c0_37] : memref<1x1x128xf32, #tpu.memory_space<vmem>>, vector<1x1x128xf32>
    %39 = vector.broadcast %19 : vector<1x1x1xf32> to vector<1x1x128xf32>
    %40 = arith.mulf %38, %39 : vector<1x1x128xf32>
    %c0_38 = arith.constant 0 : index
    %c0_39 = arith.constant 0 : index
    %c0_40 = arith.constant 0 : index
    %41 = vector.load %arg8[%c0_38, %c0_39, %c0_40] : memref<1x1x128xf32, #tpu.memory_space<vmem>>, vector<1x1x128xf32>
    tpu.vector_store %arg8[%c0_38, %c0_39, %c0_40], %40 {strides = array<i32>} : memref<1x1x128xf32, #tpu.memory_space<vmem>>, vector<1x1x128xf32>,
    %c0_41 = arith.constant 0 : index
    %42 = arith.index_cast %arg1 : i32 to index
    %c0_42 = arith.constant 0 : index
    %43 = vector.load %arg8[%c0_41, %42, %c0_42] : memref<1x1x128xf32, #tpu.memory_space<vmem>>, vector<1x1x128xf32>
    tpu.vector_store %arg8[%c0_41, %42, %c0_42], %22 {strides = array<i32>} : memref<1x1x128xf32, #tpu.memory_space<vmem>>, vector<1x1x128xf32>,
    %c0_i32_43 = arith.constant 0 : i32
    %44 = arith.cmpi eq, %arg1, %c0_i32_43 : i32
    %45 = arith.extui %44 : i1 to i32
    %c0_i32_44 = arith.constant 0 : i32
    %46 = arith.cmpi ne, %45, %c0_i32_44 : i32
    scf.if %46 {
      %c0_45 = arith.constant 0 : index
      %c0_46 = arith.constant 0 : index
      %c0_47 = arith.constant 0 : index
      %47 = vector.load %arg10[%c0_45, %c0_46, %c0_47] : memref<1x1x1xf32, #tpu.memory_space<vmem>>, vector<1x1x1xf32>
      %48 = tpu.reciprocal %47 {approx = true} : vector<1x1x1xf32> -> vector<1x1x1xf32>
      %c0_48 = arith.constant 0 : index
      %c0_49 = arith.constant 0 : index
      %c0_50 = arith.constant 0 : index
      %49 = vector.load %arg11[%c0_48, %c0_49, %c0_50] : memref<1x1x128xf32, #tpu.memory_space<vmem>>, vector<1x1x128xf32>
      %50 = vector.broadcast %48 : vector<1x1x1xf32> to vector<1x1x128xf32>
      %51 = arith.mulf %49, %50 : vector<1x1x128xf32>
      %c0_51 = arith.constant 0 : index
      %c0_52 = arith.constant 0 : index
      %c0_53 = arith.constant 0 : index
      %52 = vector.load %arg7[%c0_51, %c0_52, %c0_53] : memref<1x1x128xf32, #tpu.memory_space<vmem>>, vector<1x1x128xf32>
      tpu.vector_store %arg7[%c0_51, %c0_52, %c0_53], %51 {strides = array<i32>} : memref<1x1x128xf32, #tpu.memory_space<vmem>>, vector<1x1x128xf32>,
      %c0_54 = arith.constant 0 : index
      %c0_55 = arith.constant 0 : index
      %c0_56 = arith.constant 0 : index
      %53 = vector.load %arg8[%c0_54, %c0_55, %c0_56] : memref<1x1x128xf32, #tpu.memory_space<vmem>>, vector<1x1x128xf32>
      %54 = vector.broadcast %48 : vector<1x1x1xf32> to vector<1x1x128xf32>
      %55 = arith.mulf %53, %54 : vector<1x1x128xf32>
      %c0_57 = arith.constant 0 : index
      %c0_58 = arith.constant 0 : index
      %c0_59 = arith.constant 0 : index
      %56 = vector.load %arg8[%c0_57, %c0_58, %c0_59] : memref<1x1x128xf32, #tpu.memory_space<vmem>>, vector<1x1x128xf32>
      tpu.vector_store %arg8[%c0_57, %c0_58, %c0_59], %55 {strides = array<i32>} : memref<1x1x128xf32, #tpu.memory_space<vmem>>, vector<1x1x128xf32>,
    } else {
    }
    return
  }
  func.func @transform_0(%arg0: i32, %arg1: i32) -> (i32, i32, i32) {
    %c0_i32 = arith.constant 0 : i32
    %c0_i32_0 = arith.constant 0 : i32
    %c0_i32_1 = arith.constant 0 : i32
    return %arg0, %c0_i32, %c0_i32_0 : i32, i32, i32
  }
  func.func @transform_1(%arg0: i32, %arg1: i32) -> (i32, i32) {
    %c0_i32 = arith.constant 0 : i32
    %c0_i32_0 = arith.constant 0 : i32
    %c0_i32_1 = arith.constant 0 : i32
    return %c0_i32, %c0_i32_0 : i32, i32
  }
  func.func @transform_2(%arg0: i32, %arg1: i32) -> (i32, i32, i32) {
    %c0_i32 = arith.constant 0 : i32
    %c0_i32_0 = arith.constant 0 : i32
    return %arg0, %arg1, %c0_i32 : i32, i32, i32
  }
  func.func @transform_3(%arg0: i32, %arg1: i32) -> (i32, i32, i32) {
    %c0_i32 = arith.constant 0 : i32
    %c0_i32_0 = arith.constant 0 : i32
    return %arg0, %arg1, %c0_i32 : i32, i32, i32
  }
  func.func @transform_4(%arg0: i32, %arg1: i32) -> (i32, i32, i32) {
    %c0_i32 = arith.constant 0 : i32
    %c0_i32_0 = arith.constant 0 : i32
    %c0_i32_1 = arith.constant 0 : i32
    return %arg0, %c0_i32, %c0_i32_0 : i32, i32, i32
  }
  func.func @transform_5(%arg0: i32, %arg1: i32) -> (i32, i32, i32) {
    %c0_i32 = arith.constant 0 : i32
    %c0_i32_0 = arith.constant 0 : i32
    %c0_i32_1 = arith.constant 0 : i32
    return %arg0, %c0_i32, %c0_i32_0 : i32, i32, i32
  }
  func.func @transform_6(%arg0: i32, %arg1: i32) -> (i32, i32, i32) {
    %c0_i32 = arith.constant 0 : i32
    %c0_i32_0 = arith.constant 0 : i32
    %c0_i32_1 = arith.constant 0 : i32
    return %arg0, %c0_i32, %c0_i32_0 : i32, i32, i32
  }
}

</mosaic_0001>

<llo_original>
// kernel: tpu_custom_call.1
$region0: #{tpu_custom_call.1}
  #allocation0 [shape = 'u32[]', space=smem, size = 0x4, offset = 0x4, fixed_abs, tag = 'smem constant byte address 0x4 - core index']
  #allocation1 [shape = 'u32[144,128]{1,0:T(1,128)}', space=vmem, size = 0x12000, scoped, tag = 'internal scratch']
  #allocation2 [shape = 'f32[1,1,1]{2,1,0:T(1,128)}', space=vmem, size = 0x200, scoped, tag = 'scratch operand']
  #allocation3 [shape = 'f32[1,1,1]{2,1,0:T(1,128)}', space=vmem, size = 0x200, scoped, tag = 'scratch operand']
  #allocation4 [shape = 'f32[1,1,128]{2,1,0:T(1,128)}', space=vmem, size = 0x200, scoped, tag = 'scratch operand']
  %s0 = inlined_call_operand.vmem [shape: bf16[2,1,32], index: 0, kind: input, shape index: {}]
  %s1 = inlined_call_operand.vmem [shape: bf16[32,32], index: 1, kind: input, shape index: {}]
  %s2 = inlined_call_operand.vmem [shape: bf16[2,128,32], index: 2, kind: input, shape index: {}]
  %s3 = inlined_call_operand.vmem [shape: bf16[2,128,128], index: 3, kind: input, shape index: {}]
  %s4 = inlined_call_operand.vmem [shape: f32[2,1,128], index: 4, kind: input, shape index: {}]
  %s5 = inlined_call_operand.hbm [shape: f32[2,1,128], index: 5, kind: output, shape index: {0}]
  %s6 = inlined_call_operand.hbm [shape: f32[2,1,128], index: 6, kind: output, shape index: {1}]
  %7 = xla_tuple %s5, %s6
  %s8 = sld [smem:[#allocation0]]
  $region69: #{tpu_custom_call.1} parent=0
    _
  %s10 = ssub.s32 1, %s8
  %s11 = scalar_select 0, %s10, %s8
  $region1: #{tpu_custom_call.1} parent=0
    #allocation5 [shape = 'u8[1024]{0}', space=vmem, size = 0x400, scoped, tag = 'output window, operand 0']
    #allocation6 [shape = 's32[2]{0}', space=sflag, size = 0x8, scoped, tag = 'scoped memory for tpu_custom_call.1']
    #allocation7 [shape = 'u8[1024]{0}', space=vmem, size = 0x400, scoped, tag = 'output window, operand 1']
    #allocation8 [shape = 's32[2]{0}', space=sflag, size = 0x8, scoped, tag = 'scoped memory for tpu_custom_call.1']
    %12 = vsyncpa [#allocation6], 0
    %s13 = scalar_lea.sflag [#allocation6], 1
    %14 = vsyncpa %s13, 0
    %15 = vsyncpa [#allocation8], 0
    %s16 = scalar_lea.sflag [#allocation8], 1
    %17 = vsyncpa %s16, 0
    loop: start=0, step=1, limit=4
    $region2: #{tpu_custom_call.1} parent=1 // loop_pre_header
      _
    $region3: #{tpu_custom_call.1} parent=1 // loop_header
      %s19 = sphi 0, %s23
      %p20 = scmp.ge.s32.totalorder %s19, 4
      %s26 = sphi 0, %s38
      %s27 = sphi 0, %s34
      %s28 = sphi 0, %s26
      %s29 = sphi 0, %s27
      %s30 = sphi 0, %s28
      %s31 = sphi 0, %s29
      %s41 = sphi 0, %s43
      %s44 = sphi 0, %s41
      %s45 = sphi 0, %s44
      %s61 = sphi 0, %s45
      %s65 = sphi 0, %s65
      %s67 = sphi 0, %s65
      %s68 = sphi 0, %s67
      %s82 = sphi 0, %s68
      %s90 = sphi 0, %s92
      %s93 = sphi 0, %s90
      %s94 = sphi 0, %s93
      %s110 = sphi 0, %s94
      %s118 = sphi 0, %s120
      %s121 = sphi 0, %s118
      %s122 = sphi 0, %s121
      %s138 = sphi 0, %s122
      %s144 = sphi 0, %s146
      %s147 = sphi 0, %s144
      %s148 = sphi 0, %s147
      %s164 = sphi 0, %s148
      %s170 = sphi 0, %s172
      %s173 = sphi 0, %s170
      %s174 = sphi 0, %s173
      %s190 = sphi 0, %s174
      %s196 = sphi 0, %s198
      %s199 = sphi 0, %s196
      %s200 = sphi 0, %s199
      %s216 = sphi 0, %s200
    $region4: #{tpu_custom_call.1} parent=1 // loop_header_branch
      %22 = sbr.rel (%p20) target = $region8
    $region5: #{tpu_custom_call.1} parent=1 // loop_body
      %s24 = ssub.s32 %s19, 1
      %s25 = ssub.s32 %s19, 2
      %s32 = sadd.s32 1, %s27
      %p33 = scmp.ge.s32.totalorder %s32, 1
      %s34 = scalar_select %p33, 0, %s32
      %s35 = sadd.s32 1, %s26
      %s36 = scalar_select %p33, %s35, %s26
      %p37 = scmp.ge.s32.totalorder %s36, 2
      %s38 = scalar_select %p37, 0, %s36
      %s39 = ssub.s32 %s26, %s38
      %p40 = scmp.eq.s32.totalorder %s39, 0
      %s42 = sadd.s32 %s41, 1
      %s43 = scalar_select %p40, %s41, %s42
      %p46 = pneg %p40
      %p47 = scmp.eq.s32.totalorder %s19, 1
      %p48 = por %p46, %p47
      %p49 = scmp.ne.s32.totalorder %s41, %s44
      %p50 = scmp.eq.s32.totalorder %s19, 0
      %p51 = por %p49, %p50
      %p52 = scmp.ne.s32.totalorder %s41, %s44
      %p53 = scmp.eq.s32.totalorder %s24, 1
      %p54 = por %p52, %p53
      %p55 = scmp.ne.s32.totalorder %s44, %s45
      %p56 = scmp.eq.s32.totalorder %s24, 0
      %p57 = por %p55, %p56
      %p58 = scmp.ne.s32.totalorder %s44, %s45
      %p59 = scmp.eq.s32.totalorder %s25, 1
      %p60 = por %p58, %p59
      %p62 = scmp.ne.s32.totalorder %s45, %s61
      %p63 = scmp.eq.s32.totalorder %s25, 0
      %p64 = por %p62, %p63
      %s66 = sadd.s32 %s65, 1
      %p69 = scmp.eq.s32.totalorder %s19, 1
      %p70 = scmp.ne.s32.totalorder %s65, %s67
      %p71 = scmp.eq.s32.totalorder %s19, 0
      %p72 = por %p70, %p71
      %p73 = scmp.ne.s32.totalorder %s65, %s67
      %p74 = scmp.eq.s32.totalorder %s24, 1
      %p75 = por %p73, %p74
      %p76 = scmp.ne.s32.totalorder %s67, %s68
      %p77 = scmp.eq.s32.totalorder %s24, 0
      %p78 = por %p76, %p77
      %p79 = scmp.ne.s32.totalorder %s67, %s68
      %p80 = scmp.eq.s32.totalorder %s25, 1
      %p81 = por %p79, %p80
      %p83 = scmp.ne.s32.totalorder %s68, %s82
      %p84 = scmp.eq.s32.totalorder %s25, 0
      %p85 = por %p83, %p84
      %s86 = ssub.s32 %s26, %s38
      %s87 = ssub.s32 %s27, %s34
      %s88 = sor.u32 %s86, %s87
      %p89 = scmp.eq.s32.totalorder %s88, 0
      %s91 = sadd.s32 %s90, 1
      %s92 = scalar_select %p89, %s90, %s91
      %p95 = pneg %p89
      %p96 = scmp.eq.s32.totalorder %s19, 1
      %p97 = por %p95, %p96
      %p98 = scmp.ne.s32.totalorder %s90, %s93
      %p99 = scmp.eq.s32.totalorder %s19, 0
      %p100 = por %p98, %p99
      %p101 = scmp.ne.s32.totalorder %s90, %s93
      %p102 = scmp.eq.s32.totalorder %s24, 1
      %p103 = por %p101, %p102
      %p104 = scmp.ne.s32.totalorder %s93, %s94
      %p105 = scmp.eq.s32.totalorder %s24, 0
      %p106 = por %p104, %p105
      %p107 = scmp.ne.s32.totalorder %s93, %s94
      %p108 = scmp.eq.s32.totalorder %s25, 1
      %p109 = por %p107, %p108
      %p111 = scmp.ne.s32.totalorder %s94, %s110
      %p112 = scmp.eq.s32.totalorder %s25, 0
      %p113 = por %p111, %p112
      %s114 = ssub.s32 %s26, %s38
      %s115 = ssub.s32 %s27, %s34
      %s116 = sor.u32 %s114, %s115
      %p117 = scmp.eq.s32.totalorder %s116, 0
      %s119 = sadd.s32 %s118, 1
      %s120 = scalar_select %p117, %s118, %s119
      %p123 = pneg %p117
      %p124 = scmp.eq.s32.totalorder %s19, 1
      %p125 = por %p123, %p124
      %p126 = scmp.ne.s32.totalorder %s118, %s121
      %p127 = scmp.eq.s32.totalorder %s19, 0
      %p128 = por %p126, %p127
      %p129 = scmp.ne.s32.totalorder %s118, %s121
      %p130 = scmp.eq.s32.totalorder %s24, 1
      %p131 = por %p129, %p130
      %p132 = scmp.ne.s32.totalorder %s121, %s122
      %p133 = scmp.eq.s32.totalorder %s24, 0
      %p134 = por %p132, %p133
      %p135 = scmp.ne.s32.totalorder %s121, %s122
      %p136 = scmp.eq.s32.totalorder %s25, 1
      %p137 = por %p135, %p136
      %p139 = scmp.ne.s32.totalorder %s122, %s138
      %p140 = scmp.eq.s32.totalorder %s25, 0
      %p141 = por %p139, %p140
      %s142 = ssub.s32 %s26, %s38
      %p143 = scmp.eq.s32.totalorder %s142, 0
      %s145 = sadd.s32 %s144, 1
      %s146 = scalar_select %p143, %s144, %s145
      %p149 = pneg %p143
      %p150 = scmp.eq.s32.totalorder %s19, 1
      %p151 = por %p149, %p150
      %p152 = scmp.ne.s32.totalorder %s144, %s147
      %p153 = scmp.eq.s32.totalorder %s19, 0
      %p154 = por %p152, %p153
      %p155 = scmp.ne.s32.totalorder %s144, %s147
      %p156 = scmp.eq.s32.totalorder %s24, 1
      %p157 = por %p155, %p156
      %p158 = scmp.ne.s32.totalorder %s147, %s148
      %p159 = scmp.eq.s32.totalorder %s24, 0
      %p160 = por %p158, %p159
      %p161 = scmp.ne.s32.totalorder %s147, %s148
      %p162 = scmp.eq.s32.totalorder %s25, 1
      %p163 = por %p161, %p162
      %p165 = scmp.ne.s32.totalorder %s148, %s164
      %p166 = scmp.eq.s32.totalorder %s25, 0
      %p167 = por %p165, %p166
      %s168 = ssub.s32 %s26, %s38
      %p169 = scmp.eq.s32.totalorder %s168, 0
      %s171 = sadd.s32 %s170, 1
      %s172 = scalar_select %p169, %s170, %s171
      %p175 = pneg %p169
      %p176 = scmp.eq.s32.totalorder %s19, 1
      %p177 = por %p175, %p176
      %p178 = scmp.ne.s32.totalorder %s170, %s173
      %p179 = scmp.eq.s32.totalorder %s19, 0
      %p180 = por %p178, %p179
      %p181 = scmp.ne.s32.totalorder %s170, %s173
      %p182 = scmp.eq.s32.totalorder %s24, 1
      %p183 = por %p181, %p182
      %p184 = scmp.ne.s32.totalorder %s173, %s174
      %p185 = scmp.eq.s32.totalorder %s24, 0
      %p186 = por %p184, %p185
      %p187 = scmp.ne.s32.totalorder %s173, %s174
      %p188 = scmp.eq.s32.totalorder %s25, 1
      %p189 = por %p187, %p188
      %p191 = scmp.ne.s32.totalorder %s174, %s190
      %p192 = scmp.eq.s32.totalorder %s25, 0
      %p193 = por %p191, %p192
      %s194 = ssub.s32 %s26, %s38
      %p195 = scmp.eq.s32.totalorder %s194, 0
      %s197 = sadd.s32 %s196, 1
      %s198 = scalar_select %p195, %s196, %s197
      %p201 = pneg %p195
      %p202 = scmp.eq.s32.totalorder %s19, 1
      %p203 = por %p201, %p202
      %p204 = scmp.ne.s32.totalorder %s196, %s199
      %p205 = scmp.eq.s32.totalorder %s19, 0
      %p206 = por %p204, %p205
      %p207 = scmp.ne.s32.totalorder %s196, %s199
      %p208 = scmp.eq.s32.totalorder %s24, 1
      %p209 = por %p207, %p208
      %p210 = scmp.ne.s32.totalorder %s199, %s200
      %p211 = scmp.eq.s32.totalorder %s24, 0
      %p212 = por %p210, %p211
      %p213 = scmp.ne.s32.totalorder %s199, %s200
      %p214 = scmp.eq.s32.totalorder %s25, 1
      %p215 = por %p213, %p214
      %p217 = scmp.ne.s32.totalorder %s200, %s216
      %p218 = scmp.eq.s32.totalorder %s25, 0
      %p219 = por %p217, %p218
      %p220 = scmp.le.s32.totalorder 1, %s19
      %p221 = scmp.lt.s32.totalorder %s19, 3
      %p222 = pnand %p220, %p221
      %p223 = pneg %p222
      // Predicated region
      $region9: #{tpu_custom_call.1} parent=5 // pred_check
        _
      $region10: #{tpu_custom_call.1} parent=5 // pred_check_branch
        %225 = sbr.rel (%p222) target = $region12
      $region11: #{tpu_custom_call.1} parent=5 // pred_region
        %s226 = ssub.s32 %s19, 1
        // Predicated region
        $region13: #{tpu_custom_call.1} parent=11 // pred_check
          %p227 = pneg %p78
        $region14: #{tpu_custom_call.1} parent=11 // pred_check_branch
          %229 = sbr.rel (%p227) target = $region16
        $region15: #{tpu_custom_call.1} parent=11 // pred_region
          _
        $region16: #{tpu_custom_call.1} parent=11 // pred_fallthru
          _
      $region12: #{tpu_custom_call.1} parent=5 // pred_fallthru
        _
      %p230 = scmp.lt.s32.totalorder %s19, 2
      // Predicated region
      $region17: #{tpu_custom_call.1} parent=5 // pred_check
        %p231 = pneg %p230
      $region18: #{tpu_custom_call.1} parent=5 // pred_check_branch
        %233 = sbr.rel (%p231) target = $region20
      $region19: #{tpu_custom_call.1} parent=5 // pred_region
        // Predicated region
        $region21: #{tpu_custom_call.1} parent=19 // pred_check
          %p234 = pneg %p51
        $region22: #{tpu_custom_call.1} parent=19 // pred_check_branch
          %236 = sbr.rel (%p234) target = $region24
        $region23: #{tpu_custom_call.1} parent=19 // pred_region
          %p237 = scmp.lt.s32.totalorder %s26, 1
          %s238 = scalar_select %p237, %s26, 1
          %s239 = scalar_lea.vmem %s0, %s238
        $region24: #{tpu_custom_call.1} parent=19 // pred_fallthru
          _
        // Predicated region
        $region25: #{tpu_custom_call.1} parent=19 // pred_check
          %p240 = pneg %p100
        $region26: #{tpu_custom_call.1} parent=19 // pred_check_branch
          %242 = sbr.rel (%p240) target = $region28
        $region27: #{tpu_custom_call.1} parent=19 // pred_region
          %s243 = smul.u32 16, %s27
          %p244 = scmp.lt.s32.totalorder %s26, 1
          %s245 = scalar_select %p244, %s26, 1
          %p246 = scmp.lt.s32.totalorder %s243, 15
          %s247 = scalar_select %p246, %s243, 15
          %s248 = smul.addr %s245, 16
          %s249 = sadd.s32 %s247, %s248
          %s250 = smul.addr %s249, 4
          %s251 = scalar_lea.vmem %s2, %s250
          %s252 = smul.u32 16, %s27
        $region28: #{tpu_custom_call.1} parent=19 // pred_fallthru
          _
        // Predicated region
        $region29: #{tpu_custom_call.1} parent=19 // pred_check
          %p253 = pneg %p128
        $region30: #{tpu_custom_call.1} parent=19 // pred_check_branch
          %255 = sbr.rel (%p253) target = $region32
        $region31: #{tpu_custom_call.1} parent=19 // pred_region
          %s256 = smul.u32 16, %s27
          %p257 = scmp.lt.s32.totalorder %s26, 1
          %s258 = scalar_select %p257, %s26, 1
          %p259 = scmp.lt.s32.totalorder %s256, 15
          %s260 = scalar_select %p259, %s256, 15
          %s261 = smul.addr %s258, 16
          %s262 = sadd.s32 %s260, %s261
          %s263 = smul.addr %s262, 4
          %s264 = scalar_lea.vmem %s3, %s263
          %s265 = smul.u32 16, %s27
        $region32: #{tpu_custom_call.1} parent=19 // pred_fallthru
          _
        // Predicated region
        $region33: #{tpu_custom_call.1} parent=19 // pred_check
          %p266 = pneg %p154
        $region34: #{tpu_custom_call.1} parent=19 // pred_check_branch
          %268 = sbr.rel (%p266) target = $region36
        $region35: #{tpu_custom_call.1} parent=19 // pred_region
          %p269 = scmp.lt.s32.totalorder %s26, 1
          %s270 = scalar_select %p269, %s26, 1
          %s271 = scalar_lea.vmem %s4, %s270
        $region36: #{tpu_custom_call.1} parent=19 // pred_fallthru
          _
      $region20: #{tpu_custom_call.1} parent=5 // pred_fallthru
        _
      %p272 = scmp.le.s32.totalorder 1, %s19
      %p273 = scmp.lt.s32.totalorder %s19, 3
      %p274 = pnand %p272, %p273
      %p275 = pneg %p274
      // Predicated region
      $region37: #{tpu_custom_call.1} parent=5 // pred_check
        _
      $region38: #{tpu_custom_call.1} parent=5 // pred_check_branch
        %277 = sbr.rel (%p274) target = $region40
      $region39: #{tpu_custom_call.1} parent=5 // pred_region
        %s278 = ssub.s32 %s19, 1
        %p279 = scmp.lt.s32.totalorder %s28, 1
        %s280 = scalar_select %p279, %s28, 1
        %s281 = scalar_lea.vmem %s0, %s280
        %p282 = pneg %p57
        %p283 = pneg %p54
        %p284 = pneg %p78
        %p285 = pneg %p75
        %s286 = smul.u32 16, %s29
        %p287 = scmp.lt.s32.totalorder %s28, 1
        %s288 = scalar_select %p287, %s28, 1
        %p289 = scmp.lt.s32.totalorder %s286, 15
        %s290 = scalar_select %p289, %s286, 15
        %s291 = smul.addr %s288, 16
        %s292 = sadd.s32 %s290, %s291
        %s293 = smul.addr %s292, 4
        %s294 = scalar_lea.vmem %s2, %s293
        %p295 = pneg %p106
        %p296 = pneg %p103
        %s297 = smul.u32 16, %s29
        %p298 = scmp.lt.s32.totalorder %s28, 1
        %s299 = scalar_select %p298, %s28, 1
        %p300 = scmp.lt.s32.totalorder %s297, 15
        %s301 = scalar_select %p300, %s297, 15
        %s302 = smul.addr %s299, 16
        %s303 = sadd.s32 %s301, %s302
        %s304 = smul.addr %s303, 4
        %s305 = scalar_lea.vmem %s3, %s304
        %p306 = pneg %p134
        %p307 = pneg %p131
        %p308 = scmp.lt.s32.totalorder %s28, 1
        %s309 = scalar_select %p308, %s28, 1
        %s310 = scalar_lea.vmem %s4, %s309
        %p311 = pneg %p160
        %p312 = pneg %p157
        %p313 = pneg %p186
        %p314 = pneg %p183
        %s315 = sand.u32 %s173, 1
        %s316 = scalar_lea.sflag [#allocation6], %s315
        %s317 = sand.u32 %s173, 1
        %s318 = scalar_lea.vmem [#allocation5], %s317
        %p319 = pneg %p212
        %p320 = pneg %p209
        %s321 = sand.u32 %s199, 1
        %s322 = scalar_lea.sflag [#allocation8], %s321
        %s323 = sand.u32 %s199, 1
        %s324 = scalar_lea.vmem [#allocation7], %s323
        %p325 = scmp.lt.s32.totalorder %s28, 1
        %s326 = scalar_select %p325, %s28, 1
        %s327 = scalar_lea.vmem %s0, %s326
        %s328 = smul.u32 16, %s29
        %p329 = scmp.lt.s32.totalorder %s28, 1
        %s330 = scalar_select %p329, %s28, 1
        %p331 = scmp.lt.s32.totalorder %s328, 15
        %s332 = scalar_select %p331, %s328, 15
        %s333 = smul.addr %s330, 16
        %s334 = sadd.s32 %s332, %s333
        %s335 = smul.addr %s334, 4
        %s336 = scalar_lea.vmem %s2, %s335
        %s337 = smul.u32 16, %s29
        %s338 = smul.u32 16, %s29
        %p339 = scmp.lt.s32.totalorder %s28, 1
        %s340 = scalar_select %p339, %s28, 1
        %p341 = scmp.lt.s32.totalorder %s338, 15
        %s342 = scalar_select %p341, %s338, 15
        %s343 = smul.addr %s340, 16
        %s344 = sadd.s32 %s342, %s343
        %s345 = smul.addr %s344, 4
        %s346 = scalar_lea.vmem %s3, %s345
        %s347 = smul.u32 16, %s29
        %p348 = scmp.lt.s32.totalorder %s28, 1
        %s349 = scalar_select %p348, %s28, 1
        %s350 = scalar_lea.vmem %s4, %s349
        %p352 = scmp.eq.s32.totalorder %s29, 0
        // Predicated region
        $region41: #{tpu_custom_call.1} parent=39 // pred_check
          %p353 = pneg %p352
        $region42: #{tpu_custom_call.1} parent=39 // pred_check_branch
          %355 = sbr.rel (%p353) target = $region44
        $region43: #{tpu_custom_call.1} parent=39 // pred_region
          %vm356 = vcmask 0
          %357 = vst.msk [vmem:[#allocation2] sm:$0x1] %vm356, -1e+30
          %358 = vst.msk [vmem:[#allocation3] sm:$0x1] %vm356, 0.0
          %359 = vst [vmem:[#allocation4] sm:$0x1] 0.0
          %360 = vst [vmem:[%s324] sm:$0x1] 0.0
        $region44: #{tpu_custom_call.1} parent=39 // pred_fallthru
          _
        %v361 = vld [vmem:[%s327] sm:$0x1]
        %v362 = vld [vmem:[%s1] sm:$0xf]
        %v363 = vld [vmem:[%s1 + $0x4] sm:$0xf]
        %v364 = vld [vmem:[%s1 + $0x8] sm:$0xf]
        %v365 = vld [vmem:[%s1 + $0xc] sm:$0xf]
        %v370 = vunpack.c.l.b16 %v362
        %v371 = vunpack.c.l.b16 %v363
        %v372 = vunpack.c.l.b16 %v364
        %v373 = vunpack.c.l.b16 %v365
        %v374 = vpack.c.b16 %v371, %v370
        %v375 = vpack.c.b16 %v373, %v372
        %vm378 = vcmask 261120
        %v380 = vsel %vm378, %v361, 0
        %382 = vmatprep.subr.bf16.mxu0 0
        %383 = vmatpush1.bf16.msra.mxu0 %v374
        %384 = vmatprep.subr.bf16.mxu0 0
        %385 = vmatpush1.bf16.msra.mxu0 %v375
        %386 = vmatprep.subr.bf16.mxu0 0
        %387 = vmatpush1.bf16.msra.mxu0 0
        %388 = vmatprep.subr.bf16.mxu0 0
        %389 = vmatpush1.bf16.msra.mxu0 0
        %390 = vmatprep.subr.bf16.mxu0 0
        %391 = vmatpush1.bf16.msra.mxu0 0
        %392 = vmatprep.subr.bf16.mxu0 0
        %393 = vmatpush1.bf16.msra.mxu0 0
        %394 = vmatprep.subr.bf16.mxu0 0
        %395 = vmatpush1.bf16.msra.mxu0 0
        %396 = vmatprep.subr.bf16.mxu0 0
        %397 = vmatpush1.bf16.msra.mxu0 0
        %398 = vmatprep.subr.bf16.mxu0 0
        %399 = vmatpush1.bf16.msra.mxu0 0
        %400 = vmatprep.subr.bf16.mxu0 0
        %401 = vmatpush1.bf16.msra.mxu0 0
        %402 = vmatprep.subr.bf16.mxu0 0
        %403 = vmatpush1.bf16.msra.mxu0 0
        %404 = vmatprep.subr.bf16.mxu0 0
        %405 = vmatpush1.bf16.msra.mxu0 0
        %406 = vmatprep.subr.bf16.mxu0 0
        %407 = vmatpush1.bf16.msra.mxu0 0
        %408 = vmatprep.subr.bf16.mxu0 0
        %409 = vmatpush1.bf16.msra.mxu0 0
        %410 = vmatprep.subr.bf16.mxu0 0
        %411 = vmatpush1.bf16.msra.mxu0 0
        %412 = vmatprep.subr.bf16.mxu0 0
        %413 = vmatpush1.bf16.msra.mxu0 0
        %414 = vmatprep.mubr.bf16.mxu0 0
        %415 = vmatmul.mubr.bf16.gmra.mrb[0].mxu0 %v380
        %v416 = vpop.f32.mrb[0].mxu0
        %v417 = vadd.f32 0.0, %v416
        %v418 = vpop.f32.mrb[0].mxu0
        %v419 = vpop.f32.mrb[0].mxu0
        %v420 = vpop.f32.mrb[0].mxu0
        %421 = vdwg.mxu0
        %v422 = vpack.c.bf16 %v417, %v417
        %v423 = vld [vmem:[%s336] sm:$0xf]
        %v424 = vld [vmem:[%s336 + $0x4] sm:$0xf]
        %v425 = vld [vmem:[%s336 + $0x8] sm:$0xf]
        %v426 = vld [vmem:[%s336 + $0xc] sm:$0xf]
        %v427 = vld [vmem:[%s336 + $0x10] sm:$0xf]
        %v428 = vld [vmem:[%s336 + $0x14] sm:$0xf]
        %v429 = vld [vmem:[%s336 + $0x18] sm:$0xf]
        %v430 = vld [vmem:[%s336 + $0x1c] sm:$0xf]
        %v431 = vld [vmem:[%s336 + $0x20] sm:$0xf]
        %v432 = vld [vmem:[%s336 + $0x24] sm:$0xf]
        %v433 = vld [vmem:[%s336 + $0x28] sm:$0xf]
        %v434 = vld [vmem:[%s336 + $0x2c] sm:$0xf]
        %v435 = vld [vmem:[%s336 + $0x30] sm:$0xf]
        %v436 = vld [vmem:[%s336 + $0x34] sm:$0xf]
        %v437 = vld [vmem:[%s336 + $0x38] sm:$0xf]
        %v438 = vld [vmem:[%s336 + $0x3c] sm:$0xf]
        %s439 = scalar_lea.vmem %s350, %s29
        %v440 = vld [vmem:[%s439] sm:$0x1]
        %v457 = vunpack.c.l.b16 %v423
        %v458 = vunpack.c.l.b16 %v424
        %v459 = vunpack.c.l.b16 %v425
        %v460 = vunpack.c.l.b16 %v426
        %v461 = vunpack.c.l.b16 %v427
        %v462 = vunpack.c.l.b16 %v428
        %v463 = vunpack.c.l.b16 %v429
        %v464 = vunpack.c.l.b16 %v430
        %v465 = vunpack.c.l.b16 %v431
        %v466 = vunpack.c.l.b16 %v432
        %v467 = vunpack.c.l.b16 %v433
        %v468 = vunpack.c.l.b16 %v434
        %v469 = vunpack.c.l.b16 %v435
        %v470 = vunpack.c.l.b16 %v436
        %v471 = vunpack.c.l.b16 %v437
        %v472 = vunpack.c.l.b16 %v438
        %v473 = vpack.c.b16 %v458, %v457
        %v474 = vpack.c.b16 %v460, %v459
        %v475 = vpack.c.b16 %v462, %v461
        %v476 = vpack.c.b16 %v464, %v463
        %v477 = vpack.c.b16 %v466, %v465
        %v478 = vpack.c.b16 %v468, %v467
        %v479 = vpack.c.b16 %v470, %v469
        %v480 = vpack.c.b16 %v472, %v471
        %v482 = vsel %vm378, %v422, 0
        %v485 = vsel %vm378, %v473, 0
        %v488 = vsel %vm378, %v474, 0
        %v491 = vsel %vm378, %v475, 0
        %v494 = vsel %vm378, %v476, 0
        %v497 = vsel %vm378, %v477, 0
        %v500 = vsel %vm378, %v478, 0
        %v503 = vsel %vm378, %v479, 0
        %v506 = vsel %vm378, %v480, 0
        %508 = vmatprep.subr.bf16.mxu0 0
        %509 = vmatpush1.bf16.xpose.msra.mxu0 %v485
        %510 = vmatprep.subr.bf16.mxu0 0
        %511 = vmatpush1.bf16.xpose.msra.mxu0 %v488
        %512 = vmatprep.subr.bf16.mxu0 0
        %513 = vmatpush1.bf16.xpose.msra.mxu0 %v491
        %514 = vmatprep.subr.bf16.mxu0 0
        %515 = vmatpush1.bf16.xpose.msra.mxu0 %v494
        %516 = vmatprep.subr.bf16.mxu0 0
        %517 = vmatpush1.bf16.xpose.msra.mxu0 %v497
        %518 = vmatprep.subr.bf16.mxu0 0
        %519 = vmatpush1.bf16.xpose.msra.mxu0 %v500
        %520 = vmatprep.subr.bf16.mxu0 0
        %521 = vmatpush1.bf16.xpose.msra.mxu0 %v503
        %522 = vmatprep.subr.bf16.mxu0 0
        %523 = vmatpush1.bf16.xpose.msra.mxu0 %v506
        %524 = vmatprep.subr.bf16.mxu0 0
        %525 = vmatpush1.bf16.xpose.msra.mxu0 0
        %526 = vmatprep.subr.bf16.mxu0 0
        %527 = vmatpush1.bf16.xpose.msra.mxu0 0
        %528 = vmatprep.subr.bf16.mxu0 0
        %529 = vmatpush1.bf16.xpose.msra.mxu0 0
        %530 = vmatprep.subr.bf16.mxu0 0
        %531 = vmatpush1.bf16.xpose.msra.mxu0 0
        %532 = vmatprep.subr.bf16.mxu0 0
        %533 = vmatpush1.bf16.xpose.msra.mxu0 0
        %534 = vmatprep.subr.bf16.mxu0 0
        %535 = vmatpush1.bf16.xpose.msra.mxu0 0
        %536 = vmatprep.subr.bf16.mxu0 0
        %537 = vmatpush1.bf16.xpose.msra.mxu0 0
        %538 = vmatprep.subr.bf16.mxu0 0
        %539 = vmatpush1.bf16.xpose.msra.mxu0 0
        %540 = vmatprep.mubr.bf16.mxu0 0
        %541 = vmatmul.mubr.bf16.gmra.mrb[0].mxu0 %v482
        %v542 = vpop.f32.mrb[0].mxu0
        %v543 = vadd.f32 %v440, %v542
        %v544 = vpop.f32.mrb[0].mxu0
        %v545 = vpop.f32.mrb[0].mxu0
        %v546 = vpop.f32.mrb[0].mxu0
        %547 = vdwg.mxu0
        %v548 = vld [vmem:[#allocation2] sm:$0x1]
        %vm549 = vcmask 1040384
        %v550 = vsel %vm549, %v543, -inf
        %551 = vmax.xlane.f32.xlu0 %v550
        %v552 = vpop.xlane.xlu0 %551
        %v553 = vmax.f32 %v548, %v552
        %v554 = vsub.f32 %v548, %v553
        %v555 = vmul.f32 %v554, 1.442695
        %v556 = vpow.pop %v555
        %558 = vset.pattern.permute.xlu0 0
        %559 = vperm.xlu0 %558, %v553
        %v560 = vpop.permute.xlu0 %559
        %v562 = vlaneseq
        %v563 = vshrl.u32 %v562, 7
        %v564 = vsub.s32 0, %v563
        %v565 = vrot.slane %v560, %v564
        %v566 = vsub.f32 %v543, %v565
        %v567 = vmul.f32 %v566, 1.442695
        %v568 = vpow.pop %v567
        %v569 = vld [vmem:[#allocation3] sm:$0x1]
        %v570 = vmul.f32 %v556, %v569
        %v571 = vsel %vm549, %v568, 0.0
        %572 = vadd.xlane.f32.xlu0 %v571
        %v573 = vpop.xlane.xlu0 %572
        %v574 = vadd.f32 %v570, %v573
        %vm575 = vcmask 0
        %576 = vst.msk [vmem:[#allocation3] sm:$0x1] %vm575, %v574
        %577 = vst.msk [vmem:[#allocation2] sm:$0x1] %vm575, %v553
        %v578 = vpack.c.bf16 %v568, %v568
        %v579 = vld [vmem:[%s346] sm:$0xf]
        %v580 = vld [vmem:[%s346 + $0x4] sm:$0xf]
        %v581 = vld [vmem:[%s346 + $0x8] sm:$0xf]
        %v582 = vld [vmem:[%s346 + $0xc] sm:$0xf]
        %v583 = vld [vmem:[%s346 + $0x10] sm:$0xf]
        %v584 = vld [vmem:[%s346 + $0x14] sm:$0xf]
        %v585 = vld [vmem:[%s346 + $0x18] sm:$0xf]
        %v586 = vld [vmem:[%s346 + $0x1c] sm:$0xf]
        %v587 = vld [vmem:[%s346 + $0x20] sm:$0xf]
        %v588 = vld [vmem:[%s346 + $0x24] sm:$0xf]
        %v589 = vld [vmem:[%s346 + $0x28] sm:$0xf]
        %v590 = vld [vmem:[%s346 + $0x2c] sm:$0xf]
        %v591 = vld [vmem:[%s346 + $0x30] sm:$0xf]
        %v592 = vld [vmem:[%s346 + $0x34] sm:$0xf]
        %v593 = vld [vmem:[%s346 + $0x38] sm:$0xf]
        %v594 = vld [vmem:[%s346 + $0x3c] sm:$0xf]
        %v611 = vunpack.c.l.b16 %v579
        %v612 = vunpack.c.l.b16 %v580
        %v613 = vunpack.c.l.b16 %v581
        %v614 = vunpack.c.l.b16 %v582
        %v615 = vunpack.c.l.b16 %v583
        %v616 = vunpack.c.l.b16 %v584
        %v617 = vunpack.c.l.b16 %v585
        %v618 = vunpack.c.l.b16 %v586
        %v619 = vunpack.c.l.b16 %v587
        %v620 = vunpack.c.l.b16 %v588
        %v621 = vunpack.c.l.b16 %v589
        %v622 = vunpack.c.l.b16 %v590
        %v623 = vunpack.c.l.b16 %v591
        %v624 = vunpack.c.l.b16 %v592
        %v625 = vunpack.c.l.b16 %v593
        %v626 = vunpack.c.l.b16 %v594
        %v627 = vpack.c.b16 %v612, %v611
        %v628 = vpack.c.b16 %v614, %v613
        %v629 = vpack.c.b16 %v616, %v615
        %v630 = vpack.c.b16 %v618, %v617
        %v631 = vpack.c.b16 %v620, %v619
        %v632 = vpack.c.b16 %v622, %v621
        %v633 = vpack.c.b16 %v624, %v623
        %v634 = vpack.c.b16 %v626, %v625
        %643 = vmatprep.subr.bf16.mxu0 0
        %644 = vmatpush1.bf16.msra.mxu0 %v627
        %645 = vmatprep.subr.bf16.mxu0 0
        %646 = vmatpush1.bf16.msra.mxu0 %v628
        %647 = vmatprep.subr.bf16.mxu0 0
        %648 = vmatpush1.bf16.msra.mxu0 %v629
        %649 = vmatprep.subr.bf16.mxu0 0
        %650 = vmatpush1.bf16.msra.mxu0 %v630
        %651 = vmatprep.subr.bf16.mxu0 0
        %652 = vmatpush1.bf16.msra.mxu0 %v631
        %653 = vmatprep.subr.bf16.mxu0 0
        %654 = vmatpush1.bf16.msra.mxu0 %v632
        %655 = vmatprep.subr.bf16.mxu0 0
        %656 = vmatpush1.bf16.msra.mxu0 %v633
        %657 = vmatprep.subr.bf16.mxu0 0
        %658 = vmatpush1.bf16.msra.mxu0 %v634
        %659 = vmatprep.subr.bf16.mxu0 0
        %660 = vmatpush1.bf16.msra.mxu0 0
        %661 = vmatprep.subr.bf16.mxu0 0
        %662 = vmatpush1.bf16.msra.mxu0 0
        %663 = vmatprep.subr.bf16.mxu0 0
        %664 = vmatpush1.bf16.msra.mxu0 0
        %665 = vmatprep.subr.bf16.mxu0 0
        %666 = vmatpush1.bf16.msra.mxu0 0
        %667 = vmatprep.subr.bf16.mxu0 0
        %668 = vmatpush1.bf16.msra.mxu0 0
        %669 = vmatprep.subr.bf16.mxu0 0
        %670 = vmatpush1.bf16.msra.mxu0 0
        %671 = vmatprep.subr.bf16.mxu0 0
        %672 = vmatpush1.bf16.msra.mxu0 0
        %673 = vmatprep.subr.bf16.mxu0 0
        %674 = vmatpush1.bf16.msra.mxu0 0
        %675 = vmatprep.mubr.bf16.mxu0 0
        %676 = vmatmul.mubr.bf16.gmra.mrb[0].mxu0 %v578
        %v677 = vpop.f32.mrb[0].mxu0
        %v678 = vadd.f32 0.0, %v677
        %v679 = vpop.f32.mrb[0].mxu0
        %v680 = vpop.f32.mrb[0].mxu0
        %v681 = vpop.f32.mrb[0].mxu0
        %682 = vdwg.mxu0
        %v683 = vld [vmem:[#allocation4] sm:$0x1]
        %685 = vset.pattern.permute.xlu0 0
        %686 = vperm.xlu0 %685, %v556
        %v687 = vpop.permute.xlu0 %686
        %v689 = vlaneseq
        %v690 = vshrl.u32 %v689, 7
        %v691 = vsub.s32 0, %v690
        %v692 = vrot.slane %v687, %v691
        %v693 = vmul.f32 %v692, %v683
        %v694 = vadd.f32 %v693, %v678
        %695 = vst [vmem:[#allocation4] sm:$0x1] %v694
        %v696 = vld [vmem:[%s324] sm:$0x1]
        %v697 = vmul.f32 %v696, %v692
        %698 = vst [vmem:[%s324] sm:$0x1] %v697
        %s699 = scalar_lea.vmem %s324, %s29 [#allocation7]
        %700 = vst [vmem:[%s699] sm:$0x1] %v568
        // Predicated region
        $region45: #{tpu_custom_call.1} parent=39 // pred_check
          %p701 = pneg %p352
        $region46: #{tpu_custom_call.1} parent=39 // pred_check_branch
          %703 = sbr.rel (%p701) target = $region48
        $region47: #{tpu_custom_call.1} parent=39 // pred_region
          %v704 = vld [vmem:[#allocation3] sm:$0x1]
          %v705 = vrcp.pop %v704
          %v706 = vld [vmem:[#allocation4] sm:$0x1]
          %708 = vset.pattern.permute.xlu0 0
          %709 = vperm.xlu0 %708, %v705
          %v710 = vpop.permute.xlu0 %709
          %v712 = vlaneseq
          %v713 = vshrl.u32 %v712, 7
          %v714 = vsub.s32 0, %v713
          %v715 = vrot.slane %v710, %v714
          %v716 = vmul.f32 %v706, %v715
          %717 = vst [vmem:[%s318] sm:$0x1] %v716
          %v718 = vld [vmem:[%s324] sm:$0x1]
          %v719 = vmul.f32 %v718, %v715
          %720 = vst [vmem:[%s324] sm:$0x1] %v719
        $region48: #{tpu_custom_call.1} parent=39 // pred_fallthru
          _
        %s721 = sand.u32 %s173, 1
        %s722 = scalar_lea.sflag [#allocation6], %s721
        %s723 = sand.u32 %s173, 1
        %s724 = scalar_lea.vmem [#allocation5], %s723
        %s725 = sand.u32 %s199, 1
        %s726 = scalar_lea.sflag [#allocation8], %s725
        %s727 = sand.u32 %s199, 1
        %s728 = scalar_lea.vmem [#allocation7], %s727
        // Predicated region
        $region49: #{tpu_custom_call.1} parent=39 // pred_check
          %p729 = pneg %p183
        $region50: #{tpu_custom_call.1} parent=39 // pred_check_branch
          %731 = sbr.rel (%p729) target = $region52
        $region51: #{tpu_custom_call.1} parent=39 // pred_region
          %s733 = ssub.s32 16, 16
          %734 = vsyncadd %s722, %s733
          %s735 = smul.addr %s28, 16
          %s736 = scalar_lea.hbm %s5, %s735
          %s738 = sshll.u32 %s724, 4
          %s739 = int_to_ptr.vmem [resolvable:$true] %s738
          %741 = dma.vmem_to_hbm [thread:$0]  %s739, 16, %s736, %s722
        $region52: #{tpu_custom_call.1} parent=39 // pred_fallthru
          _
        // Predicated region
        $region53: #{tpu_custom_call.1} parent=39 // pred_check
          %p742 = pneg %p209
        $region54: #{tpu_custom_call.1} parent=39 // pred_check_branch
          %744 = sbr.rel (%p742) target = $region56
        $region55: #{tpu_custom_call.1} parent=39 // pred_region
          %s746 = ssub.s32 16, 16
          %747 = vsyncadd %s726, %s746
          %s748 = smul.addr %s28, 16
          %s749 = scalar_lea.hbm %s6, %s748
          %s751 = sshll.u32 %s728, 4
          %s752 = int_to_ptr.vmem [resolvable:$true] %s751
          %754 = dma.vmem_to_hbm [thread:$0]  %s752, 16, %s749, %s726
        $region56: #{tpu_custom_call.1} parent=39 // pred_fallthru
          _
      $region40: #{tpu_custom_call.1} parent=5 // pred_fallthru
        _
      %p755 = scmp.le.s32.totalorder 2, %s19
      // Predicated region
      $region57: #{tpu_custom_call.1} parent=5 // pred_check
        %p756 = pneg %p755
      $region58: #{tpu_custom_call.1} parent=5 // pred_check_branch
        %758 = sbr.rel (%p756) target = $region60
      $region59: #{tpu_custom_call.1} parent=5 // pred_region
        %s759 = ssub.s32 %s19, 2
        // Predicated region
        $region61: #{tpu_custom_call.1} parent=59 // pred_check
          %p760 = pneg %p189
        $region62: #{tpu_custom_call.1} parent=59 // pred_check_branch
          %762 = sbr.rel (%p760) target = $region64
        $region63: #{tpu_custom_call.1} parent=59 // pred_region
          %s763 = sand.u32 %s174, 1
          %s764 = scalar_lea.sflag [#allocation6], %s763
          %s765 = sand.u32 %s174, 1
          %s766 = scalar_lea.vmem [#allocation5], %s765
          %767 = dma.done %s764, 16
        $region64: #{tpu_custom_call.1} parent=59 // pred_fallthru
          _
        // Predicated region
        $region65: #{tpu_custom_call.1} parent=59 // pred_check
          %p768 = pneg %p215
        $region66: #{tpu_custom_call.1} parent=59 // pred_check_branch
          %770 = sbr.rel (%p768) target = $region68
        $region67: #{tpu_custom_call.1} parent=59 // pred_region
          %s771 = sand.u32 %s200, 1
          %s772 = scalar_lea.sflag [#allocation8], %s771
          %s773 = sand.u32 %s200, 1
          %s774 = scalar_lea.vmem [#allocation7], %s773
          %775 = dma.done %s772, 16
        $region68: #{tpu_custom_call.1} parent=59 // pred_fallthru
          _
      $region60: #{tpu_custom_call.1} parent=5 // pred_fallthru
        _
    $region6: #{tpu_custom_call.1} parent=1 // loop_footer
      %s23 = sadd.s32 1, %s19
    $region7: #{tpu_custom_call.1} parent=1 // loop_footer_branch
      %18 = sbr.rel target = $region3
    $region8: #{tpu_custom_call.1} parent=1 // loop_exit
      _
    %776 = vsyncpa [#allocation6], 1
    %s777 = scalar_lea.sflag [#allocation6], 1
    %778 = vsyncpa %s777, 1
    %779 = vsyncpa [#allocation8], 1
    %s780 = scalar_lea.sflag [#allocation8], 1
    %781 = vsyncpa %s780, 1

</llo_original>
